<compile_context>
chip_gen: v7x
topology: tpu7x:2x2x1
jax: 0.10.0
libtpu: 0.0.40
codegen_flags: <defaults>
</compile_context>

<pallas_src>
import functools

import jax
import jax.numpy as jnp
from jax import lax
from jax.experimental import pallas as pl
from jax.experimental.pallas import tpu as pltpu


def _round_up(x, m):
    return ((x + m - 1) // m) * m


def _pad_to(x, target_shape, fill=0):
    """Pad x up to target_shape with `fill` (no-op if already that shape)."""
    if tuple(x.shape) == tuple(target_shape):
        return x
    pads = [(0, t - s) for s, t in zip(x.shape, target_shape)]
    return jnp.pad(x, pads, constant_values=fill)


def _predicate_kernel(idx_ref, enc_ref, w_ref, b_ref,
                      logpv_ref, score_ref, acc_ref):
    # idx_ref:   (1, Tt, n_sub) int32   sub-token indices, -1 = nul
    # enc_ref:   (1, St, Hp)    bf16    encoder tile for this (batch, src) block
    # w_ref:     (Hp, Lp)       f32     padded linear weight (transposed)
    # b_ref:     (1, Lp)        f32     padded bias (-1e30 in padded columns)
    # outputs:   (1, Tt, Lp)    f32     log_pv and v_score (lane-dense, padded)
    # acc_ref:   (Tt, Hp)       f32     compact accumulator over src blocks
    s_blk = pl.program_id(2)

    @pl.when(s_blk == 0)
    def _init():
        acc_ref[...] = jnp.zeros_like(acc_ref)

    idx = idx_ref[0]                      # (Tt, n_sub) int32
    enc = enc_ref[0]                      # (St, Hp)    bf16
    tok_tile = idx.shape[0]
    n_sub = idx.shape[1]
    src_tile = enc.shape[0]

    # Build the selection matrix for this source block on the fly:
    # sel[t, s] = #{k : idx[t, k] == global_s}.  nul (-1) never matches.
    pos = (lax.broadcasted_iota(jnp.int32, (tok_tile, src_tile), 1)
           + s_blk * src_tile)
    sel = jnp.zeros((tok_tile, src_tile), jnp.float32)
    for k in range(n_sub):                # static, n_sub is tiny
        sel = sel + (pos == idx[:, k:k + 1]).astype(jnp.float32)

    # Gather+sum expressed as an MXU matmul: (Tt, St) @ (St, Hp) -> (Tt, Hp)
    acc_ref[...] += jnp.dot(sel.astype(enc.dtype), enc,
                            preferred_element_type=jnp.float32)

    @pl.when(s_blk == pl.num_programs(2) - 1)
    def _finalize():
        # Linear f_v: (Tt, Hp) @ (Hp, Lp) + b -> (Tt, Lp); padded cols = -1e30
        score = jnp.dot(acc_ref[...], w_ref[...],
                        preferred_element_type=jnp.float32) + b_ref[...]
        # Numerically stable log-softmax over the (padded) label axis.
        m = jnp.max(score, axis=-1, keepdims=True)
        lse = m + jnp.log(jnp.sum(jnp.exp(score - m), axis=-1, keepdims=True))
        score_ref[0] = score.astype(score_ref.dtype)
        logpv_ref[0] = (score - lse).astype(logpv_ref.dtype)


@functools.partial(jax.jit, static_argnames=("compact_mode",))
def predicate_classifier(enc, sub2tok_idx, weight, bias,
                         compact_mode="whole_word"):
    """Pallas implementation of PredicateClassifier.forward.

    enc:         (batch_l, source_l, hidden) float32
    sub2tok_idx: (batch_l, tok_l, n_sub) int32, nul entries are -1
    weight:      (num_label, hidden)  -- PyTorch nn.Linear weight layout
    bias:        (num_label,)
    Returns (log_pv, v_score) each of shape (batch_l, tok_l, num_label).
    """
    batch_l, source_l, hidden = enc.shape

    if compact_mode == "whole_word":
        idx = sub2tok_idx                       # (B, T, n_sub): sum over subs
    elif compact_mode == "first_subtok":
        idx = sub2tok_idx[:, :, :1]             # (B, T, 1): squeeze via sum
    else:
        raise ValueError(f"unrecognized compact_mode: {compact_mode}")

    tok_l, n_sub = idx.shape[1], idx.shape[2]
    num_label = weight.shape[0]

    # ---- padded / tiled sizes ------------------------------------------------
    hidden_pad = _round_up(hidden, 128)
    label_pad = _round_up(max(num_label, 128), 128)

    tok0 = _round_up(max(tok_l, 8), 8)
    tok_tile = min(tok0, 256)
    tok_pad = _round_up(tok0, tok_tile)

    src0 = _round_up(max(source_l, 128), 128)
    src_tile = min(src0, 512)
    src_pad = _round_up(src0, src_tile)

    # ---- padded inputs (pads are zeros / -1 / -1e30 so results are exact) ----
    enc_p = _pad_to(enc.astype(jnp.bfloat16),
                    (batch_l, src_pad, hidden_pad), fill=0)
    idx_p = _pad_to(idx.astype(jnp.int32),
                    (batch_l, tok_pad, n_sub), fill=-1)
    w_p = _pad_to(weight.T.astype(jnp.float32),
                  (hidden_pad, label_pad), fill=0.0)
    b_p = _pad_to(bias.reshape(1, num_label).astype(jnp.float32),
                  (1, label_pad), fill=-1e30)

    grid = (batch_l, tok_pad // tok_tile, src_pad // src_tile)

    grid_spec = pltpu.PrefetchScalarGridSpec(
        num_scalar_prefetch=0,
        grid=grid,
        in_specs=[
            pl.BlockSpec((1, tok_tile, n_sub), lambda b, t, s: (b, t, 0)),
            pl.BlockSpec((1, src_tile, hidden_pad), lambda b, t, s: (b, s, 0)),
            pl.BlockSpec((hidden_pad, label_pad), lambda b, t, s: (0, 0)),
            pl.BlockSpec((1, label_pad), lambda b, t, s: (0, 0)),
        ],
        out_specs=[
            pl.BlockSpec((1, tok_tile, label_pad), lambda b, t, s: (b, t, 0)),
            pl.BlockSpec((1, tok_tile, label_pad), lambda b, t, s: (b, t, 0)),
        ],
        scratch_shapes=[pltpu.VMEM((tok_tile, hidden_pad), jnp.float32)],
    )

    log_pv_p, v_score_p = pl.pallas_call(
        _predicate_kernel,
        grid_spec=grid_spec,
        out_shape=(
            jax.ShapeDtypeStruct((batch_l, tok_pad, label_pad), jnp.float32),
            jax.ShapeDtypeStruct((batch_l, tok_pad, label_pad), jnp.float32),
        ),
        compiler_params=pltpu.CompilerParams(
            dimension_semantics=("parallel", "parallel", "arbitrary")),
    )(idx_p, enc_p, w_p, b_p)

    log_pv = log_pv_p[:, :tok_l, :num_label]
    v_score = v_score_p[:, :tok_l, :num_label]
    return log_pv, v_score


def _reference(enc, sub2tok_idx, weight, bias, compact_mode="whole_word"):
    """Pure-JAX f32 reference mirroring the PyTorch forward."""
    idx = sub2tok_idx if compact_mode == "whole_word" else sub2tok_idx[:, :, :1]
    valid = (idx >= 0)
    safe_idx = jnp.where(valid, idx, 0)
    gathered = jnp.take_along_axis(
        enc[:, None, :, :],                                  # (B,1,S,H)
        safe_idx[..., None].repeat(enc.shape[-1], axis=-1),  # (B,T,n,H)
        axis=2)
    gathered = jnp.where(valid[..., None], gathered, 0.0)
    compact = gathered.sum(2)                                # (B,T,H)
    v_score = compact @ weight.T + bias
    log_pv = jax.nn.log_softmax(v_score, axis=-1)
    return log_pv, v_score


if __name__ == "__main__":
    key = jax.random.PRNGKey(0)
    k_enc, k_w, k_b, k_idx = jax.random.split(key, 4)

    batch_l, source_l, hidden, num_label, n_sub = 2, 16, 32, 5, 3
    tok_l = source_l  # module views the compact output back to source_l

    enc = jax.random.normal(k_enc, (batch_l, source_l, hidden), jnp.float32)
    weight = jax.random.normal(k_w, (num_label, hidden), jnp.float32) * 0.1
    bias = jax.random.normal(k_b, (num_label,), jnp.float32) * 0.1

    # sub2tok_idx: each token maps to up to n_sub sub-token positions; -1 = nul
    sub2tok_idx = jax.random.randint(
        k_idx, (batch_l, tok_l, n_sub), minval=-1, maxval=source_l,
        dtype=jnp.int32)

    log_pv, v_score = predicate_classifier(enc, sub2tok_idx, weight, bias,
                                           compact_mode="whole_word")
    jax.block_until_ready((log_pv, v_score))

    # f32 reference; tolerance relaxed because enc is fed to the MXU as bf16.
    ref_log_pv, ref_v_score = _reference(enc, sub2tok_idx, weight, bias,
                                         compact_mode="whole_word")
    assert jnp.allclose(v_score, ref_v_score, atol=5e-2, rtol=5e-2)
    assert jnp.allclose(log_pv, ref_log_pv, atol=5e-2, rtol=5e-2)
    assert v_score.shape == (batch_l, tok_l, num_label)
    assert log_pv.shape == (batch_l, tok_l, num_label)

    print("KERNEL_OK")
</pallas_src>

<mosaic_0001>
module attributes {stable_mosaic.version = 11 : i64} {
  func.func @_predicate_kernel(%arg0: i32, %arg1: i32, %arg2: i32, %arg3: memref<1x16x3xi32, #tpu.memory_space<vmem>>, %arg4: memref<1x128x128xbf16, #tpu.memory_space<vmem>>, %arg5: memref<128x128xf32, #tpu.memory_space<vmem>>, %arg6: memref<1x128xf32, #tpu.memory_space<vmem>>, %arg7: memref<1x16x128xf32, #tpu.memory_space<vmem>>, %arg8: memref<1x16x128xf32, #tpu.memory_space<vmem>>, %arg9: memref<16x128xf32, #tpu.memory_space<vmem>>) attributes {dimension_semantics = [#tpu.dimension_semantics<parallel>, #tpu.dimension_semantics<parallel>, #tpu.dimension_semantics<arbitrary>], iteration_bounds = array<i64: 2, 1, 1>, scalar_prefetch = 0 : i64, scratch_operands = 1 : i64, tpu.core_type = #tpu.core_type<tc>, window_params = [{transform_indices = @transform_0, window_bounds = array<i64: 1, 16, 3>}, {transform_indices = @transform_1, window_bounds = array<i64: 1, 128, 128>}, {pipeline_mode = #tpu.pipeline_mode<synchronous>, transform_indices = @transform_2, window_bounds = array<i64: 128, 128>}, {pipeline_mode = #tpu.pipeline_mode<synchronous>, transform_indices = @transform_3, window_bounds = array<i64: 1, 128>}, {transform_indices = @transform_4, window_bounds = array<i64: 1, 16, 128>}, {transform_indices = @transform_5, window_bounds = array<i64: 1, 16, 128>}]} {
    %c0_i32 = arith.constant 0 : i32
    %0 = arith.cmpi eq, %arg2, %c0_i32 : i32
    %1 = arith.extui %0 : i1 to i32
    %c0_i32_0 = arith.constant 0 : i32
    %2 = arith.cmpi ne, %1, %c0_i32_0 : i32
    scf.if %2 {
      %cst_13 = arith.constant 0.000000e+00 : f32
      %38 = vector.broadcast %cst_13 : f32 to vector<16x128xf32>
      %c0_14 = arith.constant 0 : index
      %c0_15 = arith.constant 0 : index
      %39 = vector.load %arg9[%c0_14, %c0_15] : memref<16x128xf32, #tpu.memory_space<vmem>>, vector<16x128xf32>
      tpu.vector_store %arg9[%c0_14, %c0_15], %38 {strides = array<i32>} : memref<16x128xf32, #tpu.memory_space<vmem>>, vector<16x128xf32>,
    } else {
    }
    %c0 = arith.constant 0 : index
    %c0_1 = arith.constant 0 : index
    %c0_2 = arith.constant 0 : index
    %3 = vector.load %arg3[%c0, %c0_1, %c0_2] : memref<1x16x3xi32, #tpu.memory_space<vmem>>, vector<1x16x3xi32>
    %4 = vector.shape_cast %3 : vector<1x16x3xi32> to vector<16x3xi32>
    %c0_3 = arith.constant 0 : index
    %c0_4 = arith.constant 0 : index
    %c0_5 = arith.constant 0 : index
    %5 = vector.load %arg4[%c0_3, %c0_4, %c0_5] : memref<1x128x128xbf16, #tpu.memory_space<vmem>>, vector<1x128x128xbf16>
    %6 = vector.shape_cast %5 : vector<1x128x128xbf16> to vector<128x128xbf16>
    %7 = tpu.iota {dimensions = array<i32: 1>} : vector<16x128xi32>
    %c128_i32 = arith.constant 128 : i32
    %8 = arith.muli %arg2, %c128_i32 : i32
    %9 = vector.broadcast %8 : i32 to vector<16x128xi32>
    %10 = arith.addi %7, %9 : vector<16x128xi32>
    %cst = arith.constant 0.000000e+00 : f32
    %11 = vector.broadcast %cst : f32 to vector<16x128xf32>
    %12 = vector.extract_strided_slice %4 {offsets = [0, 0], sizes = [16, 1], strides = [1, 1]} : vector<16x3xi32> to vector<16x1xi32>
    %13 = vector.broadcast %12 : vector<16x1xi32> to vector<16x128xi32>
    %14 = arith.cmpi eq, %10, %13 : vector<16x128xi32>
    %15 = arith.extui %14 : vector<16x128xi1> to vector<16x128xi32>
    %16 = arith.sitofp %15 : vector<16x128xi32> to vector<16x128xf32>
    %17 = arith.addf %11, %16 : vector<16x128xf32>
    %18 = vector.extract_strided_slice %4 {offsets = [0, 1], sizes = [16, 1], strides = [1, 1]} : vector<16x3xi32> to vector<16x1xi32>
    %19 = vector.broadcast %18 : vector<16x1xi32> to vector<16x128xi32>
    %20 = arith.cmpi eq, %10, %19 : vector<16x128xi32>
    %21 = arith.extui %20 : vector<16x128xi1> to vector<16x128xi32>
    %22 = arith.sitofp %21 : vector<16x128xi32> to vector<16x128xf32>
    %23 = arith.addf %17, %22 : vector<16x128xf32>
    %24 = vector.extract_strided_slice %4 {offsets = [0, 2], sizes = [16, 1], strides = [1, 1]} : vector<16x3xi32> to vector<16x1xi32>
    %25 = vector.broadcast %24 : vector<16x1xi32> to vector<16x128xi32>
    %26 = arith.cmpi eq, %10, %25 : vector<16x128xi32>
    %27 = arith.extui %26 : vector<16x128xi1> to vector<16x128xi32>
    %28 = arith.sitofp %27 : vector<16x128xi32> to vector<16x128xf32>
    %29 = arith.addf %23, %28 : vector<16x128xf32>
    %c0_6 = arith.constant 0 : index
    %c0_7 = arith.constant 0 : index
    %30 = vector.load %arg9[%c0_6, %c0_7] : memref<16x128xf32, #tpu.memory_space<vmem>>, vector<16x128xf32>
    %31 = arith.truncf %29 : vector<16x128xf32> to vector<16x128xbf16>
    %cst_8 = arith.constant dense<0.000000e+00> : vector<16x128xf32>
    %32 = tpu.matmul %31, %6, %cst_8 {dimension_numbers = #tpu.dot_dimension_numbers<[1], [0], [0], [1], [0, 0, 1, 1], [], []>} : vector<16x128xbf16>, vector<128x128xbf16>, vector<16x128xf32> -> vector<16x128xf32>
    %33 = arith.addf %30, %32 : vector<16x128xf32>
    %c0_9 = arith.constant 0 : index
    %c0_10 = arith.constant 0 : index
    %34 = vector.load %arg9[%c0_9, %c0_10] : memref<16x128xf32, #tpu.memory_space<vmem>>, vector<16x128xf32>
    tpu.vector_store %arg9[%c0_9, %c0_10], %33 {strides = array<i32>} : memref<16x128xf32, #tpu.memory_space<vmem>>, vector<16x128xf32>,
    %c0_i32_11 = arith.constant 0 : i32
    %35 = arith.cmpi eq, %arg2, %c0_i32_11 : i32
    %36 = arith.extui %35 : i1 to i32
    %c0_i32_12 = arith.constant 0 : i32
    %37 = arith.cmpi ne, %36, %c0_i32_12 : i32
    scf.if %37 {
      %c0_13 = arith.constant 0 : index
      %c0_14 = arith.constant 0 : index
      %38 = vector.load %arg9[%c0_13, %c0_14] : memref<16x128xf32, #tpu.memory_space<vmem>>, vector<16x128xf32>
      %c0_15 = arith.constant 0 : index
      %c0_16 = arith.constant 0 : index
      %39 = vector.load %arg5[%c0_15, %c0_16] : memref<128x128xf32, #tpu.memory_space<vmem>>, vector<128x128xf32>
      %cst_17 = arith.constant dense<0.000000e+00> : vector<16x128xf32>
      %40 = tpu.matmul %38, %39, %cst_17 {dimension_numbers = #tpu.dot_dimension_numbers<[1], [0], [0], [1], [0, 0, 1, 1], [], []>} : vector<16x128xf32>, vector<128x128xf32>, vector<16x128xf32> -> vector<16x128xf32>
      %c0_18 = arith.constant 0 : index
      %c0_19 = arith.constant 0 : index
      %41 = vector.load %arg6[%c0_18, %c0_19] : memref<1x128xf32, #tpu.memory_space<vmem>>, vector<1x128xf32>
      %42 = vector.broadcast %41 : vector<1x128xf32> to vector<16x128xf32>
      %43 = arith.addf %40, %42 : vector<16x128xf32>
      %cst_20 = arith.constant dense<0xFF800000> : vector<16xf32>
      %44 = vector.multi_reduction <maximumf>, %43, %cst_20 [1] : vector<16x128xf32> to vector<16xf32>
      %45 = vector.shape_cast %44 : vector<16xf32> to vector<16x1xf32>
      %46 = vector.broadcast %45 : vector<16x1xf32> to vector<16x128xf32>
      %47 = arith.subf %43, %46 : vector<16x128xf32>
      %48 = math.exp %47 : vector<16x128xf32>
      %cst_21 = arith.constant dense<0.000000e+00> : vector<16xf32>
      %49 = vector.multi_reduction <add>, %48, %cst_21 [1] : vector<16x128xf32> to vector<16xf32>
      %50 = vector.shape_cast %49 : vector<16xf32> to vector<16x1xf32>
      %51 = math.log %50 : vector<16x1xf32>
      %52 = arith.addf %45, %51 : vector<16x1xf32>
      %c0_22 = arith.constant 0 : index
      %c0_23 = arith.constant 0 : index
      %c0_24 = arith.constant 0 : index
      %53 = vector.load %arg8[%c0_22, %c0_23, %c0_24] : memref<1x16x128xf32, #tpu.memory_space<vmem>>, vector<1x16x128xf32>
      %54 = vector.shape_cast %53 : vector<1x16x128xf32> to vector<16x128xf32>
      %55 = vector.shape_cast %43 : vector<16x128xf32> to vector<1x16x128xf32>
      tpu.vector_store %arg8[%c0_22, %c0_23, %c0_24], %55 {strides = array<i32>} : memref<1x16x128xf32, #tpu.memory_space<vmem>>, vector<1x16x128xf32>,
      %56 = vector.broadcast %52 : vector<16x1xf32> to vector<16x128xf32>
      %57 = arith.subf %43, %56 : vector<16x128xf32>
      %c0_25 = arith.constant 0 : index
      %c0_26 = arith.constant 0 : index
      %c0_27 = arith.constant 0 : index
      %58 = vector.load %arg7[%c0_25, %c0_26, %c0_27] : memref<1x16x128xf32, #tpu.memory_space<vmem>>, vector<1x16x128xf32>
      %59 = vector.shape_cast %58 : vector<1x16x128xf32> to vector<16x128xf32>
      %60 = vector.shape_cast %57 : vector<16x128xf32> to vector<1x16x128xf32>
      tpu.vector_store %arg7[%c0_25, %c0_26, %c0_27], %60 {strides = array<i32>} : memref<1x16x128xf32, #tpu.memory_space<vmem>>, vector<1x16x128xf32>,
    } else {
    }
    return
  }
  func.func @transform_0(%arg0: i32, %arg1: i32, %arg2: i32) -> (i32, i32, i32) {
    %c0_i32 = arith.constant 0 : i32
    %c0_i32_0 = arith.constant 0 : i32
    return %arg0, %arg1, %c0_i32 : i32, i32, i32
  }
  func.func @transform_1(%arg0: i32, %arg1: i32, %arg2: i32) -> (i32, i32, i32) {
    %c0_i32 = arith.constant 0 : i32
    %c0_i32_0 = arith.constant 0 : i32
    return %arg0, %arg2, %c0_i32 : i32, i32, i32
  }
  func.func @transform_2(%arg0: i32, %arg1: i32, %arg2: i32) -> (i32, i32) {
    %c0_i32 = arith.constant 0 : i32
    %c0_i32_0 = arith.constant 0 : i32
    %c0_i32_1 = arith.constant 0 : i32
    return %c0_i32, %c0_i32_0 : i32, i32
  }
  func.func @transform_3(%arg0: i32, %arg1: i32, %arg2: i32) -> (i32, i32) {
    %c0_i32 = arith.constant 0 : i32
    %c0_i32_0 = arith.constant 0 : i32
    %c0_i32_1 = arith.constant 0 : i32
    return %c0_i32, %c0_i32_0 : i32, i32
  }
  func.func @transform_4(%arg0: i32, %arg1: i32, %arg2: i32) -> (i32, i32, i32) {
    %c0_i32 = arith.constant 0 : i32
    %c0_i32_0 = arith.constant 0 : i32
    return %arg0, %arg1, %c0_i32 : i32, i32, i32
  }
  func.func @transform_5(%arg0: i32, %arg1: i32, %arg2: i32) -> (i32, i32, i32) {
    %c0_i32 = arith.constant 0 : i32
    %c0_i32_0 = arith.constant 0 : i32
    return %arg0, %arg1, %c0_i32 : i32, i32, i32
  }
}

</mosaic_0001>

<llo_original>
// kernel: predicate_classifier.1
$region0: #{predicate_classifier.1}
  #allocation0 [shape = 'u32[]', space=smem, size = 0x4, offset = 0x4, fixed_abs, tag = 'smem constant byte address 0x4 - core index']
  #allocation1 [shape = 'u32[144,128]{1,0:T(1,128)}', space=vmem, size = 0x12000, scoped, tag = 'internal scratch']
  #allocation2 [shape = 'f32[16,128]{1,0:T(8,128)}', space=vmem, size = 0x2000, scoped, tag = 'scratch operand']
  %s0 = inlined_call_operand.vmem [shape: s32[2,16,3], index: 0, kind: input, shape index: {}]
  %s1 = inlined_call_operand.vmem [shape: bf16[2,128,128], index: 1, kind: input, shape index: {}]
  %s2 = inlined_call_operand.vmem [shape: f32[128,128], index: 2, kind: input, shape index: {}]
  %s3 = inlined_call_operand.vmem [shape: f32[1,128], index: 3, kind: input, shape index: {}]
  %s4 = inlined_call_operand.vmem [shape: f32[2,16,128], index: 4, kind: output, shape index: {0}]
  %s5 = inlined_call_operand.vmem [shape: f32[2,16,128], index: 5, kind: output, shape index: {1}]
  %6 = xla_tuple %s4, %s5
  %s7 = sld [smem:[#allocation0]]
  $region65: #{predicate_classifier.1} parent=0
    _
  %s9 = ssub.s32 1, %s7
  %s10 = scalar_select 0, %s9, %s7
  loop: start=0, step=1, limit=4
  $region2: #{predicate_classifier.1} parent=0 // loop_pre_header
    _
  $region3: #{predicate_classifier.1} parent=0 // loop_header
    %s12 = sphi 0, %s16
    %p13 = scmp.ge.s32.totalorder %s12, 4
    %s19 = sphi 0, %s38
    %s20 = sphi 0, %s34
    %s21 = sphi 0, %s30
    %s22 = sphi 0, %s19
    %s23 = sphi 0, %s20
    %s24 = sphi 0, %s21
    %s25 = sphi 0, %s22
    %s26 = sphi 0, %s23
    %s27 = sphi 0, %s24
    %s43 = sphi 0, %s45
    %s46 = sphi 0, %s43
    %s47 = sphi 0, %s46
    %s63 = sphi 0, %s47
    %s71 = sphi 0, %s73
    %s74 = sphi 0, %s71
    %s75 = sphi 0, %s74
    %s91 = sphi 0, %s75
    %s95 = sphi 0, %s95
    %s97 = sphi 0, %s95
    %s98 = sphi 0, %s97
    %s112 = sphi 0, %s98
    %s116 = sphi 0, %s116
    %s118 = sphi 0, %s116
    %s119 = sphi 0, %s118
    %s133 = sphi 0, %s119
    %s141 = sphi 0, %s143
    %s144 = sphi 0, %s141
    %s145 = sphi 0, %s144
    %s161 = sphi 0, %s145
    %s169 = sphi 0, %s171
    %s172 = sphi 0, %s169
    %s173 = sphi 0, %s172
    %s189 = sphi 0, %s173
  $region4: #{predicate_classifier.1} parent=0 // loop_header_branch
    %15 = sbr.rel (%p13) target = $region8
  $region5: #{predicate_classifier.1} parent=0 // loop_body
    %s17 = ssub.s32 %s12, 1
    %s18 = ssub.s32 %s12, 2
    %s28 = sadd.s32 1, %s21
    %p29 = scmp.ge.s32.totalorder %s28, 1
    %s30 = scalar_select %p29, 0, %s28
    %s31 = sadd.s32 1, %s20
    %s32 = scalar_select %p29, %s31, %s20
    %p33 = scmp.ge.s32.totalorder %s32, 1
    %s34 = scalar_select %p33, 0, %s32
    %s35 = sadd.s32 1, %s19
    %s36 = scalar_select %p33, %s35, %s19
    %p37 = scmp.ge.s32.totalorder %s36, 2
    %s38 = scalar_select %p37, 0, %s36
    %s39 = ssub.s32 %s19, %s38
    %s40 = ssub.s32 %s20, %s34
    %s41 = sor.u32 %s39, %s40
    %p42 = scmp.eq.s32.totalorder %s41, 0
    %s44 = sadd.s32 %s43, 1
    %s45 = scalar_select %p42, %s43, %s44
    %p48 = pneg %p42
    %p49 = scmp.eq.s32.totalorder %s12, 1
    %p50 = por %p48, %p49
    %p51 = scmp.ne.s32.totalorder %s43, %s46
    %p52 = scmp.eq.s32.totalorder %s12, 0
    %p53 = por %p51, %p52
    %p54 = scmp.ne.s32.totalorder %s43, %s46
    %p55 = scmp.eq.s32.totalorder %s17, 1
    %p56 = por %p54, %p55
    %p57 = scmp.ne.s32.totalorder %s46, %s47
    %p58 = scmp.eq.s32.totalorder %s17, 0
    %p59 = por %p57, %p58
    %p60 = scmp.ne.s32.totalorder %s46, %s47
    %p61 = scmp.eq.s32.totalorder %s18, 1
    %p62 = por %p60, %p61
    %p64 = scmp.ne.s32.totalorder %s47, %s63
    %p65 = scmp.eq.s32.totalorder %s18, 0
    %p66 = por %p64, %p65
    %s67 = ssub.s32 %s19, %s38
    %s68 = ssub.s32 %s21, %s30
    %s69 = sor.u32 %s67, %s68
    %p70 = scmp.eq.s32.totalorder %s69, 0
    %s72 = sadd.s32 %s71, 1
    %s73 = scalar_select %p70, %s71, %s72
    %p76 = pneg %p70
    %p77 = scmp.eq.s32.totalorder %s12, 1
    %p78 = por %p76, %p77
    %p79 = scmp.ne.s32.totalorder %s71, %s74
    %p80 = scmp.eq.s32.totalorder %s12, 0
    %p81 = por %p79, %p80
    %p82 = scmp.ne.s32.totalorder %s71, %s74
    %p83 = scmp.eq.s32.totalorder %s17, 1
    %p84 = por %p82, %p83
    %p85 = scmp.ne.s32.totalorder %s74, %s75
    %p86 = scmp.eq.s32.totalorder %s17, 0
    %p87 = por %p85, %p86
    %p88 = scmp.ne.s32.totalorder %s74, %s75
    %p89 = scmp.eq.s32.totalorder %s18, 1
    %p90 = por %p88, %p89
    %p92 = scmp.ne.s32.totalorder %s75, %s91
    %p93 = scmp.eq.s32.totalorder %s18, 0
    %p94 = por %p92, %p93
    %s96 = sadd.s32 %s95, 1
    %p99 = scmp.eq.s32.totalorder %s12, 1
    %p100 = scmp.ne.s32.totalorder %s95, %s97
    %p101 = scmp.eq.s32.totalorder %s12, 0
    %p102 = por %p100, %p101
    %p103 = scmp.ne.s32.totalorder %s95, %s97
    %p104 = scmp.eq.s32.totalorder %s17, 1
    %p105 = por %p103, %p104
    %p106 = scmp.ne.s32.totalorder %s97, %s98
    %p107 = scmp.eq.s32.totalorder %s17, 0
    %p108 = por %p106, %p107
    %p109 = scmp.ne.s32.totalorder %s97, %s98
    %p110 = scmp.eq.s32.totalorder %s18, 1
    %p111 = por %p109, %p110
    %p113 = scmp.ne.s32.totalorder %s98, %s112
    %p114 = scmp.eq.s32.totalorder %s18, 0
    %p115 = por %p113, %p114
    %s117 = sadd.s32 %s116, 1
    %p120 = scmp.eq.s32.totalorder %s12, 1
    %p121 = scmp.ne.s32.totalorder %s116, %s118
    %p122 = scmp.eq.s32.totalorder %s12, 0
    %p123 = por %p121, %p122
    %p124 = scmp.ne.s32.totalorder %s116, %s118
    %p125 = scmp.eq.s32.totalorder %s17, 1
    %p126 = por %p124, %p125
    %p127 = scmp.ne.s32.totalorder %s118, %s119
    %p128 = scmp.eq.s32.totalorder %s17, 0
    %p129 = por %p127, %p128
    %p130 = scmp.ne.s32.totalorder %s118, %s119
    %p131 = scmp.eq.s32.totalorder %s18, 1
    %p132 = por %p130, %p131
    %p134 = scmp.ne.s32.totalorder %s119, %s133
    %p135 = scmp.eq.s32.totalorder %s18, 0
    %p136 = por %p134, %p135
    %s137 = ssub.s32 %s19, %s38
    %s138 = ssub.s32 %s20, %s34
    %s139 = sor.u32 %s137, %s138
    %p140 = scmp.eq.s32.totalorder %s139, 0
    %s142 = sadd.s32 %s141, 1
    %s143 = scalar_select %p140, %s141, %s142
    %p146 = pneg %p140
    %p147 = scmp.eq.s32.totalorder %s12, 1
    %p148 = por %p146, %p147
    %p149 = scmp.ne.s32.totalorder %s141, %s144
    %p150 = scmp.eq.s32.totalorder %s12, 0
    %p151 = por %p149, %p150
    %p152 = scmp.ne.s32.totalorder %s141, %s144
    %p153 = scmp.eq.s32.totalorder %s17, 1
    %p154 = por %p152, %p153
    %p155 = scmp.ne.s32.totalorder %s144, %s145
    %p156 = scmp.eq.s32.totalorder %s17, 0
    %p157 = por %p155, %p156
    %p158 = scmp.ne.s32.totalorder %s144, %s145
    %p159 = scmp.eq.s32.totalorder %s18, 1
    %p160 = por %p158, %p159
    %p162 = scmp.ne.s32.totalorder %s145, %s161
    %p163 = scmp.eq.s32.totalorder %s18, 0
    %p164 = por %p162, %p163
    %s165 = ssub.s32 %s19, %s38
    %s166 = ssub.s32 %s20, %s34
    %s167 = sor.u32 %s165, %s166
    %p168 = scmp.eq.s32.totalorder %s167, 0
    %s170 = sadd.s32 %s169, 1
    %s171 = scalar_select %p168, %s169, %s170
    %p174 = pneg %p168
    %p175 = scmp.eq.s32.totalorder %s12, 1
    %p176 = por %p174, %p175
    %p177 = scmp.ne.s32.totalorder %s169, %s172
    %p178 = scmp.eq.s32.totalorder %s12, 0
    %p179 = por %p177, %p178
    %p180 = scmp.ne.s32.totalorder %s169, %s172
    %p181 = scmp.eq.s32.totalorder %s17, 1
    %p182 = por %p180, %p181
    %p183 = scmp.ne.s32.totalorder %s172, %s173
    %p184 = scmp.eq.s32.totalorder %s17, 0
    %p185 = por %p183, %p184
    %p186 = scmp.ne.s32.totalorder %s172, %s173
    %p187 = scmp.eq.s32.totalorder %s18, 1
    %p188 = por %p186, %p187
    %p190 = scmp.ne.s32.totalorder %s173, %s189
    %p191 = scmp.eq.s32.totalorder %s18, 0
    %p192 = por %p190, %p191
    %p193 = scmp.le.s32.totalorder 1, %s12
    %p194 = scmp.lt.s32.totalorder %s12, 3
    %p195 = pnand %p193, %p194
    %p196 = pneg %p195
    // Predicated region
    $region9: #{predicate_classifier.1} parent=5 // pred_check
      _
    $region10: #{predicate_classifier.1} parent=5 // pred_check_branch
      %198 = sbr.rel (%p195) target = $region12
    $region11: #{predicate_classifier.1} parent=5 // pred_region
      %s199 = ssub.s32 %s12, 1
      // Predicated region
      $region13: #{predicate_classifier.1} parent=11 // pred_check
        %p200 = pneg %p108
      $region14: #{predicate_classifier.1} parent=11 // pred_check_branch
        %202 = sbr.rel (%p200) target = $region16
      $region15: #{predicate_classifier.1} parent=11 // pred_region
        _
      $region16: #{predicate_classifier.1} parent=11 // pred_fallthru
        _
      // Predicated region
      $region17: #{predicate_classifier.1} parent=11 // pred_check
        %p203 = pneg %p129
      $region18: #{predicate_classifier.1} parent=11 // pred_check_branch
        %205 = sbr.rel (%p203) target = $region20
      $region19: #{predicate_classifier.1} parent=11 // pred_region
        _
      $region20: #{predicate_classifier.1} parent=11 // pred_fallthru
        _
    $region12: #{predicate_classifier.1} parent=5 // pred_fallthru
      _
    %p206 = scmp.lt.s32.totalorder %s12, 2
    // Predicated region
    $region21: #{predicate_classifier.1} parent=5 // pred_check
      %p207 = pneg %p206
    $region22: #{predicate_classifier.1} parent=5 // pred_check_branch
      %209 = sbr.rel (%p207) target = $region24
    $region23: #{predicate_classifier.1} parent=5 // pred_region
      // Predicated region
      $region25: #{predicate_classifier.1} parent=23 // pred_check
        %p210 = pneg %p53
      $region26: #{predicate_classifier.1} parent=23 // pred_check_branch
        %212 = sbr.rel (%p210) target = $region28
      $region27: #{predicate_classifier.1} parent=23 // pred_region
        %s213 = smul.u32 2, %s20
        %p214 = scmp.lt.s32.totalorder %s19, 1
        %s215 = scalar_select %p214, %s19, 1
        %p216 = scmp.lt.s32.totalorder %s213, 1
        %s217 = scalar_select %p216, %s213, 1
        %s218 = smul.addr %s215, 2
        %s219 = sadd.s32 %s217, %s218
        %s220 = smul.addr %s219, 8
        %s221 = scalar_lea.vmem %s0, %s220
        %s222 = smul.u32 2, %s20
      $region28: #{predicate_classifier.1} parent=23 // pred_fallthru
        _
      // Predicated region
      $region29: #{predicate_classifier.1} parent=23 // pred_check
        %p223 = pneg %p81
      $region30: #{predicate_classifier.1} parent=23 // pred_check_branch
        %225 = sbr.rel (%p223) target = $region32
      $region31: #{predicate_classifier.1} parent=23 // pred_region
        %s226 = smul.u32 16, %s21
        %p227 = scmp.lt.s32.totalorder %s19, 1
        %s228 = scalar_select %p227, %s19, 1
        %p229 = scmp.lt.s32.totalorder %s226, 15
        %s230 = scalar_select %p229, %s226, 15
        %s231 = smul.addr %s228, 16
        %s232 = sadd.s32 %s230, %s231
        %s233 = smul.addr %s232, 4
        %s234 = scalar_lea.vmem %s1, %s233
        %s235 = smul.u32 16, %s21
      $region32: #{predicate_classifier.1} parent=23 // pred_fallthru
        _
    $region24: #{predicate_classifier.1} parent=5 // pred_fallthru
      _
    %p236 = scmp.le.s32.totalorder 1, %s12
    %p237 = scmp.lt.s32.totalorder %s12, 3
    %p238 = pnand %p236, %p237
    %p239 = pneg %p238
    // Predicated region
    $region33: #{predicate_classifier.1} parent=5 // pred_check
      _
    $region34: #{predicate_classifier.1} parent=5 // pred_check_branch
      %241 = sbr.rel (%p238) target = $region36
    $region35: #{predicate_classifier.1} parent=5 // pred_region
      %s242 = ssub.s32 %s12, 1
      %s243 = smul.u32 2, %s23
      %p244 = scmp.lt.s32.totalorder %s22, 1
      %s245 = scalar_select %p244, %s22, 1
      %p246 = scmp.lt.s32.totalorder %s243, 1
      %s247 = scalar_select %p246, %s243, 1
      %s248 = smul.addr %s245, 2
      %s249 = sadd.s32 %s247, %s248
      %s250 = smul.addr %s249, 8
      %s251 = scalar_lea.vmem %s0, %s250
      %p252 = pneg %p59
      %p253 = pneg %p56
      %s254 = smul.u32 16, %s24
      %p255 = scmp.lt.s32.totalorder %s22, 1
      %s256 = scalar_select %p255, %s22, 1
      %p257 = scmp.lt.s32.totalorder %s254, 15
      %s258 = scalar_select %p257, %s254, 15
      %s259 = smul.addr %s256, 16
      %s260 = sadd.s32 %s258, %s259
      %s261 = smul.addr %s260, 4
      %s262 = scalar_lea.vmem %s1, %s261
      %p263 = pneg %p87
      %p264 = pneg %p84
      %p265 = pneg %p108
      %p266 = pneg %p105
      %p267 = pneg %p129
      %p268 = pneg %p126
      %p269 = pneg %p157
      %p270 = pneg %p154
      %s271 = smul.u32 2, %s23
      %p272 = scmp.lt.s32.totalorder %s22, 1
      %s273 = scalar_select %p272, %s22, 1
      %p274 = scmp.lt.s32.totalorder %s271, 1
      %s275 = scalar_select %p274, %s271, 1
      %s276 = smul.addr %s273, 2
      %s277 = sadd.s32 %s275, %s276
      %s278 = smul.addr %s277, 8
      %s279 = scalar_lea.vmem %s4, %s278
      %p280 = pneg %p185
      %p281 = pneg %p182
      %s282 = smul.u32 2, %s23
      %p283 = scmp.lt.s32.totalorder %s22, 1
      %s284 = scalar_select %p283, %s22, 1
      %p285 = scmp.lt.s32.totalorder %s282, 1
      %s286 = scalar_select %p285, %s282, 1
      %s287 = smul.addr %s284, 2
      %s288 = sadd.s32 %s286, %s287
      %s289 = smul.addr %s288, 8
      %s290 = scalar_lea.vmem %s5, %s289
      %s291 = smul.u32 2, %s23
      %p292 = scmp.lt.s32.totalorder %s22, 1
      %s293 = scalar_select %p292, %s22, 1
      %p294 = scmp.lt.s32.totalorder %s291, 1
      %s295 = scalar_select %p294, %s291, 1
      %s296 = smul.addr %s293, 2
      %s297 = sadd.s32 %s295, %s296
      %s298 = smul.addr %s297, 8
      %s299 = scalar_lea.vmem %s0, %s298
      %s300 = smul.u32 2, %s23
      %s301 = smul.u32 16, %s24
      %p302 = scmp.lt.s32.totalorder %s22, 1
      %s303 = scalar_select %p302, %s22, 1
      %p304 = scmp.lt.s32.totalorder %s301, 15
      %s305 = scalar_select %p304, %s301, 15
      %s306 = smul.addr %s303, 16
      %s307 = sadd.s32 %s305, %s306
      %s308 = smul.addr %s307, 4
      %s309 = scalar_lea.vmem %s1, %s308
      %s310 = smul.u32 16, %s24
      %s311 = smul.u32 2, %s23
      %p312 = scmp.lt.s32.totalorder %s22, 1
      %s313 = scalar_select %p312, %s22, 1
      %p314 = scmp.lt.s32.totalorder %s311, 1
      %s315 = scalar_select %p314, %s311, 1
      %s316 = smul.addr %s313, 2
      %s317 = sadd.s32 %s315, %s316
      %s318 = smul.addr %s317, 8
      %s319 = scalar_lea.vmem %s4, %s318
      %s320 = smul.u32 2, %s23
      %s321 = smul.u32 2, %s23
      %p322 = scmp.lt.s32.totalorder %s22, 1
      %s323 = scalar_select %p322, %s22, 1
      %p324 = scmp.lt.s32.totalorder %s321, 1
      %s325 = scalar_select %p324, %s321, 1
      %s326 = smul.addr %s323, 2
      %s327 = sadd.s32 %s325, %s326
      %s328 = smul.addr %s327, 8
      %s329 = scalar_lea.vmem %s5, %s328
      %s330 = smul.u32 2, %s23
      %p332 = scmp.eq.s32.totalorder %s24, 0
      // Predicated region
      $region37: #{predicate_classifier.1} parent=35 // pred_check
        %p333 = pneg %p332
      $region38: #{predicate_classifier.1} parent=35 // pred_check_branch
        %335 = sbr.rel (%p333) target = $region40
      $region39: #{predicate_classifier.1} parent=35 // pred_region
        %336 = vst [vmem:[#allocation2] sm:$0xff] 0.0
        %337 = vst [vmem:[#allocation2 + $0x8] sm:$0xff] 0.0
      $region40: #{predicate_classifier.1} parent=35 // pred_fallthru
        _
      %v338 = vld [vmem:[%s299] sm:$0xff]
      %v339 = vld [vmem:[%s299 + $0x8] sm:$0xff]
      %v340 = vld [vmem:[%s309] sm:$0xf]
      %v341 = vld [vmem:[%s309 + $0x4] sm:$0xf]
      %v342 = vld [vmem:[%s309 + $0x8] sm:$0xf]
      %v343 = vld [vmem:[%s309 + $0xc] sm:$0xf]
      %v344 = vld [vmem:[%s309 + $0x10] sm:$0xf]
      %v345 = vld [vmem:[%s309 + $0x14] sm:$0xf]
      %v346 = vld [vmem:[%s309 + $0x18] sm:$0xf]
      %v347 = vld [vmem:[%s309 + $0x1c] sm:$0xf]
      %v348 = vld [vmem:[%s309 + $0x20] sm:$0xf]
      %v349 = vld [vmem:[%s309 + $0x24] sm:$0xf]
      %v350 = vld [vmem:[%s309 + $0x28] sm:$0xf]
      %v351 = vld [vmem:[%s309 + $0x2c] sm:$0xf]
      %v352 = vld [vmem:[%s309 + $0x30] sm:$0xf]
      %v353 = vld [vmem:[%s309 + $0x34] sm:$0xf]
      %v354 = vld [vmem:[%s309 + $0x38] sm:$0xf]
      %v355 = vld [vmem:[%s309 + $0x3c] sm:$0xf]
      %v356 = vlaneseq
      %v357 = vand.u32 %v356, 127
      %s358 = smul.u32 %s24, 128
      %v359 = vstv %s358
      %v360 = vadd.s32 %v357, %v359
      %361 = vset.pattern.permute.xlu0 0
      %362 = vperm.xlu0 %361, %v338
      %v363 = vpop.permute.xlu0 %362
      %364 = vset.pattern.permute.xlu0 0
      %365 = vperm.xlu0 %364, %v339
      %v366 = vpop.permute.xlu0 %365
      %vm367 = vcmp.eq.s32.totalorder %v360, %v363
      %vm368 = vcmp.eq.s32.totalorder %v360, %v366
      %v369 = vsel %vm367, 1, 0
      %v370 = vsel %vm368, 1, 0
      %v371 = vcvt.s32.f32 %v369
      %v372 = vcvt.s32.f32 %v370
      %v373 = vadd.f32 %v371, 0.0
      %v374 = vadd.f32 %v372, 0.0
      %375 = vset.pattern.permute.xlu0 1
      %376 = vperm.xlu0 %375, %v338
      %v377 = vpop.permute.xlu0 %376
      %378 = vset.pattern.permute.xlu0 1
      %379 = vperm.xlu0 %378, %v339
      %v380 = vpop.permute.xlu0 %379
      %vm381 = vcmp.eq.s32.totalorder %v360, %v377
      %vm382 = vcmp.eq.s32.totalorder %v360, %v380
      %v383 = vsel %vm381, 1, 0
      %v384 = vsel %vm382, 1, 0
      %v385 = vcvt.s32.f32 %v383
      %v386 = vcvt.s32.f32 %v384
      %v387 = vadd.f32 %v373, %v385
      %v388 = vadd.f32 %v374, %v386
      %389 = vset.pattern.permute.xlu0 2
      %390 = vperm.xlu0 %389, %v338
      %v391 = vpop.permute.xlu0 %390
      %392 = vset.pattern.permute.xlu0 2
      %393 = vperm.xlu0 %392, %v339
      %v394 = vpop.permute.xlu0 %393
      %vm395 = vcmp.eq.s32.totalorder %v360, %v391
      %vm396 = vcmp.eq.s32.totalorder %v360, %v394
      %v397 = vsel %vm395, 1, 0
      %v398 = vsel %vm396, 1, 0
      %v399 = vcvt.s32.f32 %v397
      %v400 = vcvt.s32.f32 %v398
      %v401 = vadd.f32 %v387, %v399
      %v402 = vadd.f32 %v388, %v400
      %v403 = vld [vmem:[#allocation2] sm:$0xff]
      %v404 = vld [vmem:[#allocation2 + $0x8] sm:$0xff]
      %v405 = vpack.c.bf16 %v402, %v401
      %v422 = vunpack.c.l.b16 %v340
      %v423 = vunpack.c.l.b16 %v341
      %v424 = vunpack.c.l.b16 %v342
      %v425 = vunpack.c.l.b16 %v343
      %v426 = vunpack.c.l.b16 %v344
      %v427 = vunpack.c.l.b16 %v345
      %v428 = vunpack.c.l.b16 %v346
      %v429 = vunpack.c.l.b16 %v347
      %v430 = vunpack.c.l.b16 %v348
      %v431 = vunpack.c.l.b16 %v349
      %v432 = vunpack.c.l.b16 %v350
      %v433 = vunpack.c.l.b16 %v351
      %v434 = vunpack.c.l.b16 %v352
      %v435 = vunpack.c.l.b16 %v353
      %v436 = vunpack.c.l.b16 %v354
      %v437 = vunpack.c.l.b16 %v355
      %v438 = vpack.c.b16 %v423, %v422
      %v439 = vpack.c.b16 %v425, %v424
      %v440 = vpack.c.b16 %v427, %v426
      %v441 = vpack.c.b16 %v429, %v428
      %v442 = vpack.c.b16 %v431, %v430
      %v443 = vpack.c.b16 %v433, %v432
      %v444 = vpack.c.b16 %v435, %v434
      %v445 = vpack.c.b16 %v437, %v436
      %454 = vmatprep.subr.bf16.mxu0 0
      %455 = vmatpush1.bf16.msra.mxu0 %v438
      %456 = vmatprep.subr.bf16.mxu0 0
      %457 = vmatpush1.bf16.msra.mxu0 %v439
      %458 = vmatprep.subr.bf16.mxu0 0
      %459 = vmatpush1.bf16.msra.mxu0 %v440
      %460 = vmatprep.subr.bf16.mxu0 0
      %461 = vmatpush1.bf16.msra.mxu0 %v441
      %462 = vmatprep.subr.bf16.mxu0 0
      %463 = vmatpush1.bf16.msra.mxu0 %v442
      %464 = vmatprep.subr.bf16.mxu0 0
      %465 = vmatpush1.bf16.msra.mxu0 %v443
      %466 = vmatprep.subr.bf16.mxu0 0
      %467 = vmatpush1.bf16.msra.mxu0 %v444
      %468 = vmatprep.subr.bf16.mxu0 0
      %469 = vmatpush1.bf16.msra.mxu0 %v445
      %470 = vmatprep.subr.bf16.mxu0 0
      %471 = vmatpush1.bf16.msra.mxu0 0
      %472 = vmatprep.subr.bf16.mxu0 0
      %473 = vmatpush1.bf16.msra.mxu0 0
      %474 = vmatprep.subr.bf16.mxu0 0
      %475 = vmatpush1.bf16.msra.mxu0 0
      %476 = vmatprep.subr.bf16.mxu0 0
      %477 = vmatpush1.bf16.msra.mxu0 0
      %478 = vmatprep.subr.bf16.mxu0 0
      %479 = vmatpush1.bf16.msra.mxu0 0
      %480 = vmatprep.subr.bf16.mxu0 0
      %481 = vmatpush1.bf16.msra.mxu0 0
      %482 = vmatprep.subr.bf16.mxu0 0
      %483 = vmatpush1.bf16.msra.mxu0 0
      %484 = vmatprep.subr.bf16.mxu0 0
      %485 = vmatpush1.bf16.msra.mxu0 0
      %486 = vmatprep.mubr.bf16.mxu0 0
      %487 = vmatmul.mubr.bf16.gmra.mrb[0].mxu0 %v405
      %v488 = vpop.f32.mrb[0].mxu0
      %v489 = vadd.f32 0.0, %v488
      %v490 = vpop.f32.mrb[0].mxu0
      %v491 = vpop.f32.mrb[0].mxu0
      %v492 = vadd.f32 0.0, %v491
      %v493 = vpop.f32.mrb[0].mxu0
      %494 = vdwg.mxu0
      %v495 = vadd.f32 %v403, %v489
      %v496 = vadd.f32 %v404, %v492
      %497 = vst [vmem:[#allocation2] sm:$0xff] %v495
      %498 = vst [vmem:[#allocation2 + $0x8] sm:$0xff] %v496
      // Predicated region
      $region41: #{predicate_classifier.1} parent=35 // pred_check
        %p499 = pneg %p332
      $region42: #{predicate_classifier.1} parent=35 // pred_check_branch
        %501 = sbr.rel (%p499) target = $region44
      $region43: #{predicate_classifier.1} parent=35 // pred_region
        %v502 = vld [vmem:[#allocation2] sm:$0xff]
        %v503 = vld [vmem:[#allocation2 + $0x8] sm:$0xff]
        %v504 = vld [vmem:[%s2] sm:$0xff]
        %v505 = vld [vmem:[%s2 + $0x8] sm:$0xff]
        %v506 = vld [vmem:[%s2 + $0x10] sm:$0xff]
        %v507 = vld [vmem:[%s2 + $0x18] sm:$0xff]
        %v508 = vld [vmem:[%s2 + $0x20] sm:$0xff]
        %v509 = vld [vmem:[%s2 + $0x28] sm:$0xff]
        %v510 = vld [vmem:[%s2 + $0x30] sm:$0xff]
        %v511 = vld [vmem:[%s2 + $0x38] sm:$0xff]
        %v512 = vld [vmem:[%s2 + $0x40] sm:$0xff]
        %v513 = vld [vmem:[%s2 + $0x48] sm:$0xff]
        %v514 = vld [vmem:[%s2 + $0x50] sm:$0xff]
        %v515 = vld [vmem:[%s2 + $0x58] sm:$0xff]
        %v516 = vld [vmem:[%s2 + $0x60] sm:$0xff]
        %v517 = vld [vmem:[%s2 + $0x68] sm:$0xff]
        %v518 = vld [vmem:[%s2 + $0x70] sm:$0xff]
        %v519 = vld [vmem:[%s2 + $0x78] sm:$0xff]
        %v520 = vld [vmem:[%s3] sm:$0x1]
        %v522 = vlaneseq
        %v523 = vshrl.u32 %v522, 7
        %v524 = vsub.s32 0, %v523
        %v525 = vrot.slane %v520, %v524
        %527 = vmatprep.subr.mxu0 0.0
        %528 = vmatpush1.msra.mxu0 %v504
        %529 = vmatprep.subr.mxu0 0.0
        %530 = vmatpush1.msra.mxu0 %v505
        %531 = vmatprep.subr.mxu0 0.0
        %532 = vmatpush1.msra.mxu0 %v506
        %533 = vmatprep.subr.mxu0 0.0
        %534 = vmatpush1.msra.mxu0 %v507
        %535 = vmatprep.subr.mxu0 0.0
        %536 = vmatpush1.msra.mxu0 %v508
        %537 = vmatprep.subr.mxu0 0.0
        %538 = vmatpush1.msra.mxu0 %v509
        %539 = vmatprep.subr.mxu0 0.0
        %540 = vmatpush1.msra.mxu0 %v510
        %541 = vmatprep.subr.mxu0 0.0
        %542 = vmatpush1.msra.mxu0 %v511
        %543 = vmatprep.subr.mxu0 0.0
        %544 = vmatpush1.msra.mxu0 %v512
        %545 = vmatprep.subr.mxu0 0.0
        %546 = vmatpush1.msra.mxu0 %v513
        %547 = vmatprep.subr.mxu0 0.0
        %548 = vmatpush1.msra.mxu0 %v514
        %549 = vmatprep.subr.mxu0 0.0
        %550 = vmatpush1.msra.mxu0 %v515
        %551 = vmatprep.subr.mxu0 0.0
        %552 = vmatpush1.msra.mxu0 %v516
        %553 = vmatprep.subr.mxu0 0.0
        %554 = vmatpush1.msra.mxu0 %v517
        %555 = vmatprep.subr.mxu0 0.0
        %556 = vmatpush1.msra.mxu0 %v518
        %557 = vmatprep.subr.mxu0 0.0
        %558 = vmatpush1.msra.mxu0 %v519
        %559 = vmatprep.subr.mxu0 0.0
        %560 = vmatpush1.msra.mxu0 0.0
        %561 = vmatprep.subr.mxu0 0.0
        %562 = vmatpush1.msra.mxu0 0.0
        %563 = vmatprep.subr.mxu0 0.0
        %564 = vmatpush1.msra.mxu0 0.0
        %565 = vmatprep.subr.mxu0 0.0
        %566 = vmatpush1.msra.mxu0 0.0
        %567 = vmatprep.subr.mxu0 0.0
        %568 = vmatpush1.msra.mxu0 0.0
        %569 = vmatprep.subr.mxu0 0.0
        %570 = vmatpush1.msra.mxu0 0.0
        %571 = vmatprep.subr.mxu0 0.0
        %572 = vmatpush1.msra.mxu0 0.0
        %573 = vmatprep.subr.mxu0 0.0
        %574 = vmatpush1.msra.mxu0 0.0
        %575 = vmatprep.subr.mxu0 0.0
        %576 = vmatpush1.msra.mxu0 0.0
        %577 = vmatprep.subr.mxu0 0.0
        %578 = vmatpush1.msra.mxu0 0.0
        %579 = vmatprep.subr.mxu0 0.0
        %580 = vmatpush1.msra.mxu0 0.0
        %581 = vmatprep.subr.mxu0 0.0
        %582 = vmatpush1.msra.mxu0 0.0
        %583 = vmatprep.subr.mxu0 0.0
        %584 = vmatpush1.msra.mxu0 0.0
        %585 = vmatprep.subr.mxu0 0.0
        %586 = vmatpush1.msra.mxu0 0.0
        %587 = vmatprep.subr.mxu0 0.0
        %588 = vmatpush1.msra.mxu0 0.0
        %589 = vmatprep.subr.mxu0 0.0
        %590 = vmatpush1.msra.mxu0 0.0
        %591 = vmatprep.mubr.f32.mxu0 0.0
        %592 = vmatmul.mubr.f32.gmra.mrb[0].mxu0 %v502
        %v593 = vpop.f32.mrb[0].mxu0
        %v594 = vadd.f32 %v525, %v593
        %v595 = vpop.f32.mrb[0].mxu0
        %596 = vmatprep.mubr.f32.mxu0 0.0
        %597 = vmatmul.mubr.f32.gmra.mrb[0].mxu0 %v503
        %v598 = vpop.f32.mrb[0].mxu0
        %v599 = vadd.f32 %v525, %v598
        %v600 = vpop.f32.mrb[0].mxu0
        %601 = vdwg.mxu0
        %602 = vmax.xlane.f32.xlu0 %v594
        %v603 = vpop.xlane.xlu0 %602
        %604 = vmax.xlane.f32.xlu0 %v599
        %v605 = vpop.xlane.xlu0 %604
        %v606 = vsub.f32 %v594, %v603
        %v607 = vsub.f32 %v599, %v605
        %v608 = vmul.f32 %v606, 1.442695
        %v609 = vpow.pop %v608
        %v610 = vmul.f32 %v607, 1.442695
        %v611 = vpow.pop %v610
        %612 = vadd.xlane.f32.xlu0 %v609
        %v613 = vpop.xlane.xlu0 %612
        %614 = vadd.xlane.f32.xlu0 %v611
        %v615 = vpop.xlane.xlu0 %614
        %v616 = vlog2.pop %v613
        %v617 = vmul.f32 %v616, 0.6931472
        %v618 = vlog2.pop %v615
        %v619 = vmul.f32 %v618, 0.6931472
        %v620 = vadd.f32 %v603, %v617
        %v621 = vadd.f32 %v605, %v619
        %622 = vst [vmem:[%s329] sm:$0xff] %v594
        %623 = vst [vmem:[%s329 + $0x8] sm:$0xff] %v599
        %v624 = vsub.f32 %v594, %v620
        %v625 = vsub.f32 %v599, %v621
        %626 = vst [vmem:[%s319] sm:$0xff] %v624
        %627 = vst [vmem:[%s319 + $0x8] sm:$0xff] %v625
      $region44: #{predicate_classifier.1} parent=35 // pred_fallthru
        _
      %s628 = smul.u32 2, %s23
      %p629 = scmp.lt.s32.totalorder %s22, 1
      %s630 = scalar_select %p629, %s22, 1
      %p631 = scmp.lt.s32.totalorder %s628, 1
      %s632 = scalar_select %p631, %s628, 1
      %s633 = smul.addr %s630, 2
      %s634 = sadd.s32 %s632, %s633
      %s635 = smul.addr %s634, 8
      %s636 = scalar_lea.vmem %s4, %s635
      %s637 = smul.u32 2, %s23
      %p638 = scmp.lt.s32.totalorder %s22, 1
      %s639 = scalar_select %p638, %s22, 1
      %p640 = scmp.lt.s32.totalorder %s637, 1
      %s641 = scalar_select %p640, %s637, 1
      %s642 = smul.addr %s639, 2
      %s643 = sadd.s32 %s641, %s642
      %s644 = smul.addr %s643, 8
      %s645 = scalar_lea.vmem %s5, %s644
      // Predicated region
      $region45: #{predicate_classifier.1} parent=35 // pred_check
        %p646 = pneg %p154
      $region46: #{predicate_classifier.1} parent=35 // pred_check_branch
        %648 = sbr.rel (%p646) target = $region48
      $region47: #{predicate_classifier.1} parent=35 // pred_region
        %s649 = smul.u32 2, %s23
      $region48: #{predicate_classifier.1} parent=35 // pred_fallthru
        _
      // Predicated region
      $region49: #{predicate_classifier.1} parent=35 // pred_check
        %p650 = pneg %p182
      $region50: #{predicate_classifier.1} parent=35 // pred_check_branch
        %652 = sbr.rel (%p650) target = $region52
      $region51: #{predicate_classifier.1} parent=35 // pred_region
        %s653 = smul.u32 2, %s23
      $region52: #{predicate_classifier.1} parent=35 // pred_fallthru
        _
    $region36: #{predicate_classifier.1} parent=5 // pred_fallthru
      _
    %p654 = scmp.le.s32.totalorder 2, %s12
    // Predicated region
    $region53: #{predicate_classifier.1} parent=5 // pred_check
      %p655 = pneg %p654
    $region54: #{predicate_classifier.1} parent=5 // pred_check_branch
      %657 = sbr.rel (%p655) target = $region56
    $region55: #{predicate_classifier.1} parent=5 // pred_region
      %s658 = ssub.s32 %s12, 2
      // Predicated region
      $region57: #{predicate_classifier.1} parent=55 // pred_check
        %p659 = pneg %p160
      $region58: #{predicate_classifier.1} parent=55 // pred_check_branch
        %661 = sbr.rel (%p659) target = $region60
      $region59: #{predicate_classifier.1} parent=55 // pred_region
        %s662 = smul.u32 2, %s26
        %p663 = scmp.lt.s32.totalorder %s25, 1
        %s664 = scalar_select %p663, %s25, 1
        %p665 = scmp.lt.s32.totalorder %s662, 1
        %s666 = scalar_select %p665, %s662, 1
        %s667 = smul.addr %s664, 2
        %s668 = sadd.s32 %s666, %s667
        %s669 = smul.addr %s668, 8
        %s670 = scalar_lea.vmem %s4, %s669
      $region60: #{predicate_classifier.1} parent=55 // pred_fallthru
        _
      // Predicated region
      $region61: #{predicate_classifier.1} parent=55 // pred_check
        %p671 = pneg %p188
      $region62: #{predicate_classifier.1} parent=55 // pred_check_branch
        %673 = sbr.rel (%p671) target = $region64
      $region63: #{predicate_classifier.1} parent=55 // pred_region
        %s674 = smul.u32 2, %s26
        %p675 = scmp.lt.s32.totalorder %s25, 1
        %s676 = scalar_select %p675, %s25, 1
        %p677 = scmp.lt.s32.totalorder %s674, 1
        %s678 = scalar_select %p677, %s674, 1
        %s679 = smul.addr %s676, 2
        %s680 = sadd.s32 %s678, %s679
        %s681 = smul.addr %s680, 8
        %s682 = scalar_lea.vmem %s5, %s681
      $region64: #{predicate_classifier.1} parent=55 // pred_fallthru
        _
    $region56: #{predicate_classifier.1} parent=5 // pred_fallthru
      _
  $region6: #{predicate_classifier.1} parent=0 // loop_footer
    %s16 = sadd.s32 1, %s12
  $region7: #{predicate_classifier.1} parent=0 // loop_footer_branch
    %11 = sbr.rel target = $region3
  $region8: #{predicate_classifier.1} parent=0 // loop_exit
    _

</llo_original>
